<compile_context>
chip_gen: v7x
topology: tpu7x:2x2x1
jax: 0.10.0
libtpu: 0.0.40
codegen_flags: <defaults>
</compile_context>

<pallas_src>
import jax
import jax.numpy as jnp
from jax.experimental import pallas as pl
from jax.experimental.pallas import tpu as pltpu

LANE = 128          # lane width of a vreg
TILE_ROWS = 1024    # sublane rows per grid step -> 1.5 MiB / input block (f32)


def _ensemble_kernel(w1_ref, w2_ref, b_ref, x1_ref, x2_ref, o_ref):
    # w1_ref, w2_ref : (3, 3) f32 in SMEM   (folded per-input weights)
    # b_ref          : (3,)   f32 in SMEM   (folded bias)
    # x1_ref, x2_ref, o_ref : (3, TS, 128) f32 in VMEM (chan x rows x lanes)
    for c in range(3):
        # Re-read the per-channel (TS, 128) slabs for every output channel:
        # VMEM re-reads are cheap and this avoids holding 6 large slabs live.
        acc = x1_ref[0] * w1_ref[c, 0]
        acc = acc + x1_ref[1] * w1_ref[c, 1]
        acc = acc + x1_ref[2] * w1_ref[c, 2]
        acc = acc + x2_ref[0] * w2_ref[c, 0]
        acc = acc + x2_ref[1] * w2_ref[c, 1]
        acc = acc + x2_ref[2] * w2_ref[c, 2]
        o_ref[c] = (acc + b_ref[c]).astype(o_ref.dtype)


def ensemble_forward(x1, x2, params, *, tile_rows=TILE_ROWS):
    """x1, x2: (N, 3, H, W) float32 (NCHW).  Returns (N, 3, H, W)."""
    wa, ba, wb, bb, wc, bc = (params[k] for k in
                              ("wa", "ba", "wb", "bb", "wc", "bc"))
    N, C, H, W = x1.shape
    assert C == 3 and x2.shape == x1.shape
    HW = H * W

    # Fold the three linear 1x1-conv stages (exact algebraic identity).
    w1_eff = wc[:, :3] @ wa                            # (3, 3)
    w2_eff = wc[:, 3:] @ wb                            # (3, 3)
    b_eff = wc[:, :3] @ ba + wc[:, 3:] @ bb + bc       # (3,)

    # Lane/sublane-dense layout: rows of 128 lanes, padded to a tile multiple.
    rows = pl.cdiv(HW, LANE)                 # rows of 128 spatial elements
    ts = max(1, min(tile_rows, rows))        # sublane rows per grid step
    rows_p = pl.cdiv(rows, ts) * ts          # padded row count
    hw_p = rows_p * LANE
    pad = hw_p - HW

    x1v = x1.reshape(N, 3, HW)
    x2v = x2.reshape(N, 3, HW)
    if pad:
        x1v = jnp.pad(x1v, ((0, 0), (0, 0), (0, pad)))
        x2v = jnp.pad(x2v, ((0, 0), (0, 0), (0, pad)))
    x1v = x1v.reshape(N, 3, rows_p, LANE)
    x2v = x2v.reshape(N, 3, rows_p, LANE)

    grid = (N, rows_p // ts)

    smem_spec = pl.BlockSpec(memory_space=pltpu.MemorySpace.SMEM)
    tile_spec = lambda: pl.BlockSpec((None, 3, ts, LANE),
                                     lambda n, j: (n, 0, j, 0))

    out = pl.pallas_call(
        _ensemble_kernel,
        out_shape=jax.ShapeDtypeStruct((N, 3, rows_p, LANE), x1.dtype),
        grid_spec=pltpu.PrefetchScalarGridSpec(
            num_scalar_prefetch=0,
            grid=grid,
            in_specs=[
                smem_spec,            # w1_eff (3, 3)  -> SMEM, whole array
                smem_spec,            # w2_eff (3, 3)  -> SMEM, whole array
                smem_spec,            # b_eff  (3,)    -> SMEM, whole array
                tile_spec(),          # x1 tile (3, TS, 128)
                tile_spec(),          # x2 tile (3, TS, 128)
            ],
            out_specs=tile_spec(),    # y tile (3, TS, 128)
        ),
        compiler_params=pltpu.CompilerParams(
            dimension_semantics=("parallel", "parallel")),
    )(w1_eff, w2_eff, b_eff, x1v, x2v)

    out = out.reshape(N, 3, hw_p)
    if pad:
        out = out[:, :, :HW]
    return out.reshape(N, 3, H, W)


# ----------------------------- verification ---------------------------------

def _conv1x1_nchw(x, w, b):
    # x: (N, Cin, H, W), w: (Cout, Cin), b: (Cout,)
    y = jnp.einsum("cd,ndhw->nchw", w, x)
    return y + b[None, :, None, None]


def _reference(x1, x2, params):
    """Plain-JAX reference mirroring the PyTorch module (unfused)."""
    a = _conv1x1_nchw(x1, params["wa"], params["ba"])
    b = _conv1x1_nchw(x2, params["wb"], params["bb"])
    cat = jnp.concatenate([a, b], axis=1)
    return _conv1x1_nchw(cat, params["wc"], params["bc"])


if __name__ == "__main__":
    key = jax.random.PRNGKey(0)
    ks = jax.random.split(key, 8)

    N, C, H, W = 2, 3, 16, 16
    x1 = jax.random.normal(ks[0], (N, C, H, W), jnp.float32)
    x2 = jax.random.normal(ks[1], (N, C, H, W), jnp.float32)

    # Deterministic parameter init (Conv2d k=1 weights squeezed to 2-D).
    # TODO(synk): modelA/modelB are unspecified in the source; modeled as
    # linear 1x1 convs so the whole forward folds exactly into the kernel.
    params = {
        "wa": jax.random.normal(ks[2], (3, 3), jnp.float32) * 0.1,  # modelA
        "ba": jax.random.normal(ks[3], (3,), jnp.float32) * 0.1,
        "wb": jax.random.normal(ks[4], (3, 3), jnp.float32) * 0.1,  # modelB
        "bb": jax.random.normal(ks[5], (3,), jnp.float32) * 0.1,
        "wc": jax.random.normal(ks[6], (3, 6), jnp.float32) * 0.1,  # 6->3
        "bc": jax.random.normal(ks[7], (3,), jnp.float32) * 0.1,
    }

    out = ensemble_forward(x1, x2, params)
    out = jax.block_until_ready(out)

    ref = _reference(x1, x2, params)
    assert out.shape == (N, 3, H, W)
    assert jnp.allclose(out, ref, atol=1e-5, rtol=1e-4), (
        float(jnp.max(jnp.abs(out - ref))))

    print("KERNEL_OK")
</pallas_src>

<mosaic_0001>
module attributes {stable_mosaic.version = 11 : i64} {
  func.func @_ensemble_kernel(%arg0: i32, %arg1: i32, %arg2: memref<3x3xf32, #tpu.memory_space<smem>>, %arg3: memref<3x3xf32, #tpu.memory_space<smem>>, %arg4: memref<3xf32, #tpu.memory_space<smem>>, %arg5: memref<1x3x2x128xf32, #tpu.memory_space<vmem>>, %arg6: memref<1x3x2x128xf32, #tpu.memory_space<vmem>>, %arg7: memref<1x3x2x128xf32, #tpu.memory_space<vmem>>) attributes {dimension_semantics = [#tpu.dimension_semantics<parallel>, #tpu.dimension_semantics<parallel>], iteration_bounds = array<i64: 2, 1>, scalar_prefetch = 0 : i64, scratch_operands = 0 : i64, tpu.core_type = #tpu.core_type<tc>, window_params = [{transform_indices = @transform_0, window_bounds = array<i64: 3, 3>}, {transform_indices = @transform_1, window_bounds = array<i64: 3, 3>}, {transform_indices = @transform_2, window_bounds = array<i64: 3>}, {transform_indices = @transform_3, window_bounds = array<i64: 1, 3, 2, 128>}, {transform_indices = @transform_4, window_bounds = array<i64: 1, 3, 2, 128>}, {transform_indices = @transform_5, window_bounds = array<i64: 1, 3, 2, 128>}]} {
    %c0 = arith.constant 0 : index
    %c0_0 = arith.constant 0 : index
    %c0_1 = arith.constant 0 : index
    %c0_2 = arith.constant 0 : index
    %0 = vector.load %arg5[%c0, %c0_0, %c0_1, %c0_2] : memref<1x3x2x128xf32, #tpu.memory_space<vmem>>, vector<1x1x2x128xf32>
    %1 = vector.shape_cast %0 : vector<1x1x2x128xf32> to vector<2x128xf32>
    %c0_3 = arith.constant 0 : index
    %c0_4 = arith.constant 0 : index
    %2 = memref.load %arg2[%c0_3, %c0_4] : memref<3x3xf32, #tpu.memory_space<smem>>
    %3 = vector.broadcast %2 : f32 to vector<2x128xf32>
    %4 = arith.mulf %1, %3 : vector<2x128xf32>
    %c0_5 = arith.constant 0 : index
    %c1 = arith.constant 1 : index
    %c0_6 = arith.constant 0 : index
    %c0_7 = arith.constant 0 : index
    %5 = vector.load %arg5[%c0_5, %c1, %c0_6, %c0_7] : memref<1x3x2x128xf32, #tpu.memory_space<vmem>>, vector<1x1x2x128xf32>
    %6 = vector.shape_cast %5 : vector<1x1x2x128xf32> to vector<2x128xf32>
    %c0_8 = arith.constant 0 : index
    %c1_9 = arith.constant 1 : index
    %7 = memref.load %arg2[%c0_8, %c1_9] : memref<3x3xf32, #tpu.memory_space<smem>>
    %8 = vector.broadcast %7 : f32 to vector<2x128xf32>
    %9 = arith.mulf %6, %8 : vector<2x128xf32>
    %10 = arith.addf %4, %9 : vector<2x128xf32>
    %c0_10 = arith.constant 0 : index
    %c2 = arith.constant 2 : index
    %c0_11 = arith.constant 0 : index
    %c0_12 = arith.constant 0 : index
    %11 = vector.load %arg5[%c0_10, %c2, %c0_11, %c0_12] : memref<1x3x2x128xf32, #tpu.memory_space<vmem>>, vector<1x1x2x128xf32>
    %12 = vector.shape_cast %11 : vector<1x1x2x128xf32> to vector<2x128xf32>
    %c0_13 = arith.constant 0 : index
    %c2_14 = arith.constant 2 : index
    %13 = memref.load %arg2[%c0_13, %c2_14] : memref<3x3xf32, #tpu.memory_space<smem>>
    %14 = vector.broadcast %13 : f32 to vector<2x128xf32>
    %15 = arith.mulf %12, %14 : vector<2x128xf32>
    %16 = arith.addf %10, %15 : vector<2x128xf32>
    %c0_15 = arith.constant 0 : index
    %c0_16 = arith.constant 0 : index
    %c0_17 = arith.constant 0 : index
    %c0_18 = arith.constant 0 : index
    %17 = vector.load %arg6[%c0_15, %c0_16, %c0_17, %c0_18] : memref<1x3x2x128xf32, #tpu.memory_space<vmem>>, vector<1x1x2x128xf32>
    %18 = vector.shape_cast %17 : vector<1x1x2x128xf32> to vector<2x128xf32>
    %c0_19 = arith.constant 0 : index
    %c0_20 = arith.constant 0 : index
    %19 = memref.load %arg3[%c0_19, %c0_20] : memref<3x3xf32, #tpu.memory_space<smem>>
    %20 = vector.broadcast %19 : f32 to vector<2x128xf32>
    %21 = arith.mulf %18, %20 : vector<2x128xf32>
    %22 = arith.addf %16, %21 : vector<2x128xf32>
    %c0_21 = arith.constant 0 : index
    %c1_22 = arith.constant 1 : index
    %c0_23 = arith.constant 0 : index
    %c0_24 = arith.constant 0 : index
    %23 = vector.load %arg6[%c0_21, %c1_22, %c0_23, %c0_24] : memref<1x3x2x128xf32, #tpu.memory_space<vmem>>, vector<1x1x2x128xf32>
    %24 = vector.shape_cast %23 : vector<1x1x2x128xf32> to vector<2x128xf32>
    %c0_25 = arith.constant 0 : index
    %c1_26 = arith.constant 1 : index
    %25 = memref.load %arg3[%c0_25, %c1_26] : memref<3x3xf32, #tpu.memory_space<smem>>
    %26 = vector.broadcast %25 : f32 to vector<2x128xf32>
    %27 = arith.mulf %24, %26 : vector<2x128xf32>
    %28 = arith.addf %22, %27 : vector<2x128xf32>
    %c0_27 = arith.constant 0 : index
    %c2_28 = arith.constant 2 : index
    %c0_29 = arith.constant 0 : index
    %c0_30 = arith.constant 0 : index
    %29 = vector.load %arg6[%c0_27, %c2_28, %c0_29, %c0_30] : memref<1x3x2x128xf32, #tpu.memory_space<vmem>>, vector<1x1x2x128xf32>
    %30 = vector.shape_cast %29 : vector<1x1x2x128xf32> to vector<2x128xf32>
    %c0_31 = arith.constant 0 : index
    %c2_32 = arith.constant 2 : index
    %31 = memref.load %arg3[%c0_31, %c2_32] : memref<3x3xf32, #tpu.memory_space<smem>>
    %32 = vector.broadcast %31 : f32 to vector<2x128xf32>
    %33 = arith.mulf %30, %32 : vector<2x128xf32>
    %34 = arith.addf %28, %33 : vector<2x128xf32>
    %c0_33 = arith.constant 0 : index
    %35 = memref.load %arg4[%c0_33] : memref<3xf32, #tpu.memory_space<smem>>
    %36 = vector.broadcast %35 : f32 to vector<2x128xf32>
    %37 = arith.addf %34, %36 : vector<2x128xf32>
    %c0_34 = arith.constant 0 : index
    %c0_35 = arith.constant 0 : index
    %c0_36 = arith.constant 0 : index
    %c0_37 = arith.constant 0 : index
    %38 = vector.load %arg7[%c0_34, %c0_35, %c0_36, %c0_37] : memref<1x3x2x128xf32, #tpu.memory_space<vmem>>, vector<1x1x2x128xf32>
    %39 = vector.shape_cast %38 : vector<1x1x2x128xf32> to vector<2x128xf32>
    %40 = vector.shape_cast %37 : vector<2x128xf32> to vector<1x1x2x128xf32>
    tpu.vector_store %arg7[%c0_34, %c0_35, %c0_36, %c0_37], %40 {strides = array<i32>} : memref<1x3x2x128xf32, #tpu.memory_space<vmem>>, vector<1x1x2x128xf32>,
    %c0_38 = arith.constant 0 : index
    %c0_39 = arith.constant 0 : index
    %c0_40 = arith.constant 0 : index
    %c0_41 = arith.constant 0 : index
    %41 = vector.load %arg5[%c0_38, %c0_39, %c0_40, %c0_41] : memref<1x3x2x128xf32, #tpu.memory_space<vmem>>, vector<1x1x2x128xf32>
    %42 = vector.shape_cast %41 : vector<1x1x2x128xf32> to vector<2x128xf32>
    %c1_42 = arith.constant 1 : index
    %c0_43 = arith.constant 0 : index
    %43 = memref.load %arg2[%c1_42, %c0_43] : memref<3x3xf32, #tpu.memory_space<smem>>
    %44 = vector.broadcast %43 : f32 to vector<2x128xf32>
    %45 = arith.mulf %42, %44 : vector<2x128xf32>
    %c0_44 = arith.constant 0 : index
    %c1_45 = arith.constant 1 : index
    %c0_46 = arith.constant 0 : index
    %c0_47 = arith.constant 0 : index
    %46 = vector.load %arg5[%c0_44, %c1_45, %c0_46, %c0_47] : memref<1x3x2x128xf32, #tpu.memory_space<vmem>>, vector<1x1x2x128xf32>
    %47 = vector.shape_cast %46 : vector<1x1x2x128xf32> to vector<2x128xf32>
    %c1_48 = arith.constant 1 : index
    %c1_49 = arith.constant 1 : index
    %48 = memref.load %arg2[%c1_48, %c1_49] : memref<3x3xf32, #tpu.memory_space<smem>>
    %49 = vector.broadcast %48 : f32 to vector<2x128xf32>
    %50 = arith.mulf %47, %49 : vector<2x128xf32>
    %51 = arith.addf %45, %50 : vector<2x128xf32>
    %c0_50 = arith.constant 0 : index
    %c2_51 = arith.constant 2 : index
    %c0_52 = arith.constant 0 : index
    %c0_53 = arith.constant 0 : index
    %52 = vector.load %arg5[%c0_50, %c2_51, %c0_52, %c0_53] : memref<1x3x2x128xf32, #tpu.memory_space<vmem>>, vector<1x1x2x128xf32>
    %53 = vector.shape_cast %52 : vector<1x1x2x128xf32> to vector<2x128xf32>
    %c1_54 = arith.constant 1 : index
    %c2_55 = arith.constant 2 : index
    %54 = memref.load %arg2[%c1_54, %c2_55] : memref<3x3xf32, #tpu.memory_space<smem>>
    %55 = vector.broadcast %54 : f32 to vector<2x128xf32>
    %56 = arith.mulf %53, %55 : vector<2x128xf32>
    %57 = arith.addf %51, %56 : vector<2x128xf32>
    %c0_56 = arith.constant 0 : index
    %c0_57 = arith.constant 0 : index
    %c0_58 = arith.constant 0 : index
    %c0_59 = arith.constant 0 : index
    %58 = vector.load %arg6[%c0_56, %c0_57, %c0_58, %c0_59] : memref<1x3x2x128xf32, #tpu.memory_space<vmem>>, vector<1x1x2x128xf32>
    %59 = vector.shape_cast %58 : vector<1x1x2x128xf32> to vector<2x128xf32>
    %c1_60 = arith.constant 1 : index
    %c0_61 = arith.constant 0 : index
    %60 = memref.load %arg3[%c1_60, %c0_61] : memref<3x3xf32, #tpu.memory_space<smem>>
    %61 = vector.broadcast %60 : f32 to vector<2x128xf32>
    %62 = arith.mulf %59, %61 : vector<2x128xf32>
    %63 = arith.addf %57, %62 : vector<2x128xf32>
    %c0_62 = arith.constant 0 : index
    %c1_63 = arith.constant 1 : index
    %c0_64 = arith.constant 0 : index
    %c0_65 = arith.constant 0 : index
    %64 = vector.load %arg6[%c0_62, %c1_63, %c0_64, %c0_65] : memref<1x3x2x128xf32, #tpu.memory_space<vmem>>, vector<1x1x2x128xf32>
    %65 = vector.shape_cast %64 : vector<1x1x2x128xf32> to vector<2x128xf32>
    %c1_66 = arith.constant 1 : index
    %c1_67 = arith.constant 1 : index
    %66 = memref.load %arg3[%c1_66, %c1_67] : memref<3x3xf32, #tpu.memory_space<smem>>
    %67 = vector.broadcast %66 : f32 to vector<2x128xf32>
    %68 = arith.mulf %65, %67 : vector<2x128xf32>
    %69 = arith.addf %63, %68 : vector<2x128xf32>
    %c0_68 = arith.constant 0 : index
    %c2_69 = arith.constant 2 : index
    %c0_70 = arith.constant 0 : index
    %c0_71 = arith.constant 0 : index
    %70 = vector.load %arg6[%c0_68, %c2_69, %c0_70, %c0_71] : memref<1x3x2x128xf32, #tpu.memory_space<vmem>>, vector<1x1x2x128xf32>
    %71 = vector.shape_cast %70 : vector<1x1x2x128xf32> to vector<2x128xf32>
    %c1_72 = arith.constant 1 : index
    %c2_73 = arith.constant 2 : index
    %72 = memref.load %arg3[%c1_72, %c2_73] : memref<3x3xf32, #tpu.memory_space<smem>>
    %73 = vector.broadcast %72 : f32 to vector<2x128xf32>
    %74 = arith.mulf %71, %73 : vector<2x128xf32>
    %75 = arith.addf %69, %74 : vector<2x128xf32>
    %c1_74 = arith.constant 1 : index
    %76 = memref.load %arg4[%c1_74] : memref<3xf32, #tpu.memory_space<smem>>
    %77 = vector.broadcast %76 : f32 to vector<2x128xf32>
    %78 = arith.addf %75, %77 : vector<2x128xf32>
    %c0_75 = arith.constant 0 : index
    %c1_76 = arith.constant 1 : index
    %c0_77 = arith.constant 0 : index
    %c0_78 = arith.constant 0 : index
    %79 = vector.load %arg7[%c0_75, %c1_76, %c0_77, %c0_78] : memref<1x3x2x128xf32, #tpu.memory_space<vmem>>, vector<1x1x2x128xf32>
    %80 = vector.shape_cast %79 : vector<1x1x2x128xf32> to vector<2x128xf32>
    %81 = vector.shape_cast %78 : vector<2x128xf32> to vector<1x1x2x128xf32>
    tpu.vector_store %arg7[%c0_75, %c1_76, %c0_77, %c0_78], %81 {strides = array<i32>} : memref<1x3x2x128xf32, #tpu.memory_space<vmem>>, vector<1x1x2x128xf32>,
    %c0_79 = arith.constant 0 : index
    %c0_80 = arith.constant 0 : index
    %c0_81 = arith.constant 0 : index
    %c0_82 = arith.constant 0 : index
    %82 = vector.load %arg5[%c0_79, %c0_80, %c0_81, %c0_82] : memref<1x3x2x128xf32, #tpu.memory_space<vmem>>, vector<1x1x2x128xf32>
    %83 = vector.shape_cast %82 : vector<1x1x2x128xf32> to vector<2x128xf32>
    %c2_83 = arith.constant 2 : index
    %c0_84 = arith.constant 0 : index
    %84 = memref.load %arg2[%c2_83, %c0_84] : memref<3x3xf32, #tpu.memory_space<smem>>
    %85 = vector.broadcast %84 : f32 to vector<2x128xf32>
    %86 = arith.mulf %83, %85 : vector<2x128xf32>
    %c0_85 = arith.constant 0 : index
    %c1_86 = arith.constant 1 : index
    %c0_87 = arith.constant 0 : index
    %c0_88 = arith.constant 0 : index
    %87 = vector.load %arg5[%c0_85, %c1_86, %c0_87, %c0_88] : memref<1x3x2x128xf32, #tpu.memory_space<vmem>>, vector<1x1x2x128xf32>
    %88 = vector.shape_cast %87 : vector<1x1x2x128xf32> to vector<2x128xf32>
    %c2_89 = arith.constant 2 : index
    %c1_90 = arith.constant 1 : index
    %89 = memref.load %arg2[%c2_89, %c1_90] : memref<3x3xf32, #tpu.memory_space<smem>>
    %90 = vector.broadcast %89 : f32 to vector<2x128xf32>
    %91 = arith.mulf %88, %90 : vector<2x128xf32>
    %92 = arith.addf %86, %91 : vector<2x128xf32>
    %c0_91 = arith.constant 0 : index
    %c2_92 = arith.constant 2 : index
    %c0_93 = arith.constant 0 : index
    %c0_94 = arith.constant 0 : index
    %93 = vector.load %arg5[%c0_91, %c2_92, %c0_93, %c0_94] : memref<1x3x2x128xf32, #tpu.memory_space<vmem>>, vector<1x1x2x128xf32>
    %94 = vector.shape_cast %93 : vector<1x1x2x128xf32> to vector<2x128xf32>
    %c2_95 = arith.constant 2 : index
    %c2_96 = arith.constant 2 : index
    %95 = memref.load %arg2[%c2_95, %c2_96] : memref<3x3xf32, #tpu.memory_space<smem>>
    %96 = vector.broadcast %95 : f32 to vector<2x128xf32>
    %97 = arith.mulf %94, %96 : vector<2x128xf32>
    %98 = arith.addf %92, %97 : vector<2x128xf32>
    %c0_97 = arith.constant 0 : index
    %c0_98 = arith.constant 0 : index
    %c0_99 = arith.constant 0 : index
    %c0_100 = arith.constant 0 : index
    %99 = vector.load %arg6[%c0_97, %c0_98, %c0_99, %c0_100] : memref<1x3x2x128xf32, #tpu.memory_space<vmem>>, vector<1x1x2x128xf32>
    %100 = vector.shape_cast %99 : vector<1x1x2x128xf32> to vector<2x128xf32>
    %c2_101 = arith.constant 2 : index
    %c0_102 = arith.constant 0 : index
    %101 = memref.load %arg3[%c2_101, %c0_102] : memref<3x3xf32, #tpu.memory_space<smem>>
    %102 = vector.broadcast %101 : f32 to vector<2x128xf32>
    %103 = arith.mulf %100, %102 : vector<2x128xf32>
    %104 = arith.addf %98, %103 : vector<2x128xf32>
    %c0_103 = arith.constant 0 : index
    %c1_104 = arith.constant 1 : index
    %c0_105 = arith.constant 0 : index
    %c0_106 = arith.constant 0 : index
    %105 = vector.load %arg6[%c0_103, %c1_104, %c0_105, %c0_106] : memref<1x3x2x128xf32, #tpu.memory_space<vmem>>, vector<1x1x2x128xf32>
    %106 = vector.shape_cast %105 : vector<1x1x2x128xf32> to vector<2x128xf32>
    %c2_107 = arith.constant 2 : index
    %c1_108 = arith.constant 1 : index
    %107 = memref.load %arg3[%c2_107, %c1_108] : memref<3x3xf32, #tpu.memory_space<smem>>
    %108 = vector.broadcast %107 : f32 to vector<2x128xf32>
    %109 = arith.mulf %106, %108 : vector<2x128xf32>
    %110 = arith.addf %104, %109 : vector<2x128xf32>
    %c0_109 = arith.constant 0 : index
    %c2_110 = arith.constant 2 : index
    %c0_111 = arith.constant 0 : index
    %c0_112 = arith.constant 0 : index
    %111 = vector.load %arg6[%c0_109, %c2_110, %c0_111, %c0_112] : memref<1x3x2x128xf32, #tpu.memory_space<vmem>>, vector<1x1x2x128xf32>
    %112 = vector.shape_cast %111 : vector<1x1x2x128xf32> to vector<2x128xf32>
    %c2_113 = arith.constant 2 : index
    %c2_114 = arith.constant 2 : index
    %113 = memref.load %arg3[%c2_113, %c2_114] : memref<3x3xf32, #tpu.memory_space<smem>>
    %114 = vector.broadcast %113 : f32 to vector<2x128xf32>
    %115 = arith.mulf %112, %114 : vector<2x128xf32>
    %116 = arith.addf %110, %115 : vector<2x128xf32>
    %c2_115 = arith.constant 2 : index
    %117 = memref.load %arg4[%c2_115] : memref<3xf32, #tpu.memory_space<smem>>
    %118 = vector.broadcast %117 : f32 to vector<2x128xf32>
    %119 = arith.addf %116, %118 : vector<2x128xf32>
    %c0_116 = arith.constant 0 : index
    %c2_117 = arith.constant 2 : index
    %c0_118 = arith.constant 0 : index
    %c0_119 = arith.constant 0 : index
    %120 = vector.load %arg7[%c0_116, %c2_117, %c0_118, %c0_119] : memref<1x3x2x128xf32, #tpu.memory_space<vmem>>, vector<1x1x2x128xf32>
    %121 = vector.shape_cast %120 : vector<1x1x2x128xf32> to vector<2x128xf32>
    %122 = vector.shape_cast %119 : vector<2x128xf32> to vector<1x1x2x128xf32>
    tpu.vector_store %arg7[%c0_116, %c2_117, %c0_118, %c0_119], %122 {strides = array<i32>} : memref<1x3x2x128xf32, #tpu.memory_space<vmem>>, vector<1x1x2x128xf32>,
    return
  }
  func.func @transform_0(%arg0: i32, %arg1: i32) -> (i32, i32) {
    %c0_i32 = arith.constant 0 : i32
    %c0_i32_0 = arith.constant 0 : i32
    %c0_i32_1 = arith.constant 0 : i32
    return %c0_i32, %c0_i32_0 : i32, i32
  }
  func.func @transform_1(%arg0: i32, %arg1: i32) -> (i32, i32) {
    %c0_i32 = arith.constant 0 : i32
    %c0_i32_0 = arith.constant 0 : i32
    %c0_i32_1 = arith.constant 0 : i32
    return %c0_i32, %c0_i32_0 : i32, i32
  }
  func.func @transform_2(%arg0: i32, %arg1: i32) -> i32 {
    %c0_i32 = arith.constant 0 : i32
    %c0_i32_0 = arith.constant 0 : i32
    return %c0_i32 : i32
  }
  func.func @transform_3(%arg0: i32, %arg1: i32) -> (i32, i32, i32, i32) {
    %c0_i32 = arith.constant 0 : i32
    %c0_i32_0 = arith.constant 0 : i32
    %c0_i32_1 = arith.constant 0 : i32
    return %arg0, %c0_i32, %arg1, %c0_i32_0 : i32, i32, i32, i32
  }
  func.func @transform_4(%arg0: i32, %arg1: i32) -> (i32, i32, i32, i32) {
    %c0_i32 = arith.constant 0 : i32
    %c0_i32_0 = arith.constant 0 : i32
    %c0_i32_1 = arith.constant 0 : i32
    return %arg0, %c0_i32, %arg1, %c0_i32_0 : i32, i32, i32, i32
  }
  func.func @transform_5(%arg0: i32, %arg1: i32) -> (i32, i32, i32, i32) {
    %c0_i32 = arith.constant 0 : i32
    %c0_i32_0 = arith.constant 0 : i32
    %c0_i32_1 = arith.constant 0 : i32
    return %arg0, %c0_i32, %arg1, %c0_i32_0 : i32, i32, i32, i32
  }
}

</mosaic_0001>

<llo_original>
// kernel: tpu_custom_call.1
$region0: #{tpu_custom_call.1}
  #allocation0 [shape = 'u32[]', space=smem, size = 0x4, offset = 0x4, fixed_abs, tag = 'smem constant byte address 0x4 - core index']
  #allocation1 [shape = 'u32[144,128]{1,0:T(1,128)}', space=vmem, size = 0x12000, scoped, tag = 'internal scratch']
  %s0 = inlined_call_operand.hbm [shape: f32[3,3], index: 0, kind: input, shape index: {}]
  %s1 = inlined_call_operand.hbm [shape: f32[3,3], index: 1, kind: input, shape index: {}]
  %s2 = inlined_call_operand.vmem [shape: f32[3], index: 2, kind: input, shape index: {}]
  %s3 = inlined_call_operand.hbm [shape: f32[2,3,2,128], index: 3, kind: input, shape index: {}]
  %s4 = inlined_call_operand.vmem [shape: f32[2,3,2,128], index: 4, kind: input, shape index: {}]
  %s5 = inlined_call_operand.hbm [shape: f32[2,3,2,128], index: 5, kind: output, shape index: {}]
  %s6 = sld [smem:[#allocation0]]
  $region69: #{tpu_custom_call.1} parent=0
    _
  %s8 = ssub.s32 1, %s6
  %s9 = scalar_select 0, %s8, %s6
  $region1: #{tpu_custom_call.1} parent=0
    #allocation2 [shape = 'u8[2048]{0}', space=smem, size = 0x800, scoped, tag = 'input window, operand 0, single buffered']
    #allocation3 [shape = 's32[2]{0}', space=sflag, size = 0x8, scoped, tag = 'scoped memory for tpu_custom_call.1']
    #allocation4 [shape = 's32[2]{0}', space=sflag, size = 0x8, scoped, tag = 'scoped memory for tpu_custom_call.1']
    #allocation5 [shape = 's32[2]{0}', space=sflag, size = 0x8, scoped, tag = 'scoped memory for tpu_custom_call.1']
    #allocation6 [shape = 's32[2]{0}', space=sflag, size = 0x8, scoped, tag = 'scoped memory for tpu_custom_call.1']
    #allocation7 [shape = 'u8[2048]{0}', space=smem, size = 0x800, scoped, tag = 'input window, operand 1, single buffered']
    #allocation8 [shape = 's32[1]{0}', space=sflag, size = 0x4, scoped, tag = 'scoped memory for tpu_custom_call.1']
    #allocation9 [shape = 'u8[512]{0}', space=smem, size = 0x200, scoped, tag = 'input window, operand 2, single buffered']
    #allocation10 [shape = 'u8[6144]{0}', space=vmem, size = 0x1800, scoped, tag = 'input window, operand 3']
    #allocation11 [shape = 'u8[6144]{0}', space=vmem, size = 0x1800, scoped, tag = 'output window, operand 0']
    %10 = vsyncpa [#allocation5], 0
    %11 = vsyncpa [#allocation8], 0
    %12 = vsyncpa [#allocation6], 0
    %13 = vsyncpa [#allocation3], 0
    %s14 = scalar_lea.sflag [#allocation3], 1
    %15 = vsyncpa %s14, 0
    %16 = vsyncpa [#allocation4], 0
    %s17 = scalar_lea.sflag [#allocation4], 1
    %18 = vsyncpa %s17, 0
    loop: start=0, step=1, limit=4
    $region2: #{tpu_custom_call.1} parent=1 // loop_pre_header
      _
    $region3: #{tpu_custom_call.1} parent=1 // loop_header
      %s20 = sphi 0, %s24
      %p21 = scmp.ge.s32.totalorder %s20, 4
      %s27 = sphi 0, %s39
      %s28 = sphi 0, %s35
      %s29 = sphi 0, %s27
      %s30 = sphi 0, %s28
      %s31 = sphi 0, %s29
      %s32 = sphi 0, %s30
      %s40 = sphi 0, %s40
      %s42 = sphi 0, %s40
      %s43 = sphi 0, %s42
      %s57 = sphi 0, %s43
      %s61 = sphi 0, %s61
      %s63 = sphi 0, %s61
      %s64 = sphi 0, %s63
      %s78 = sphi 0, %s64
      %s82 = sphi 0, %s82
      %s84 = sphi 0, %s82
      %s85 = sphi 0, %s84
      %s99 = sphi 0, %s85
      %s107 = sphi 0, %s109
      %s110 = sphi 0, %s107
      %s111 = sphi 0, %s110
      %s127 = sphi 0, %s111
      %s135 = sphi 0, %s137
      %s138 = sphi 0, %s135
      %s139 = sphi 0, %s138
      %s155 = sphi 0, %s139
      %s163 = sphi 0, %s165
      %s166 = sphi 0, %s163
      %s167 = sphi 0, %s166
      %s183 = sphi 0, %s167
    $region4: #{tpu_custom_call.1} parent=1 // loop_header_branch
      %23 = sbr.rel (%p21) target = $region8
    $region5: #{tpu_custom_call.1} parent=1 // loop_body
      %s25 = ssub.s32 %s20, 1
      %s26 = ssub.s32 %s20, 2
      %s33 = sadd.s32 1, %s28
      %p34 = scmp.ge.s32.totalorder %s33, 1
      %s35 = scalar_select %p34, 0, %s33
      %s36 = sadd.s32 1, %s27
      %s37 = scalar_select %p34, %s36, %s27
      %p38 = scmp.ge.s32.totalorder %s37, 2
      %s39 = scalar_select %p38, 0, %s37
      %s41 = sadd.s32 %s40, 1
      %p44 = scmp.eq.s32.totalorder %s20, 1
      %p45 = scmp.ne.s32.totalorder %s40, %s42
      %p46 = scmp.eq.s32.totalorder %s20, 0
      %p47 = por %p45, %p46
      %p48 = scmp.ne.s32.totalorder %s40, %s42
      %p49 = scmp.eq.s32.totalorder %s25, 1
      %p50 = por %p48, %p49
      %p51 = scmp.ne.s32.totalorder %s42, %s43
      %p52 = scmp.eq.s32.totalorder %s25, 0
      %p53 = por %p51, %p52
      %p54 = scmp.ne.s32.totalorder %s42, %s43
      %p55 = scmp.eq.s32.totalorder %s26, 1
      %p56 = por %p54, %p55
      %p58 = scmp.ne.s32.totalorder %s43, %s57
      %p59 = scmp.eq.s32.totalorder %s26, 0
      %p60 = por %p58, %p59
      %s62 = sadd.s32 %s61, 1
      %p65 = scmp.eq.s32.totalorder %s20, 1
      %p66 = scmp.ne.s32.totalorder %s61, %s63
      %p67 = scmp.eq.s32.totalorder %s20, 0
      %p68 = por %p66, %p67
      %p69 = scmp.ne.s32.totalorder %s61, %s63
      %p70 = scmp.eq.s32.totalorder %s25, 1
      %p71 = por %p69, %p70
      %p72 = scmp.ne.s32.totalorder %s63, %s64
      %p73 = scmp.eq.s32.totalorder %s25, 0
      %p74 = por %p72, %p73
      %p75 = scmp.ne.s32.totalorder %s63, %s64
      %p76 = scmp.eq.s32.totalorder %s26, 1
      %p77 = por %p75, %p76
      %p79 = scmp.ne.s32.totalorder %s64, %s78
      %p80 = scmp.eq.s32.totalorder %s26, 0
      %p81 = por %p79, %p80
      %s83 = sadd.s32 %s82, 1
      %p86 = scmp.eq.s32.totalorder %s20, 1
      %p87 = scmp.ne.s32.totalorder %s82, %s84
      %p88 = scmp.eq.s32.totalorder %s20, 0
      %p89 = por %p87, %p88
      %p90 = scmp.ne.s32.totalorder %s82, %s84
      %p91 = scmp.eq.s32.totalorder %s25, 1
      %p92 = por %p90, %p91
      %p93 = scmp.ne.s32.totalorder %s84, %s85
      %p94 = scmp.eq.s32.totalorder %s25, 0
      %p95 = por %p93, %p94
      %p96 = scmp.ne.s32.totalorder %s84, %s85
      %p97 = scmp.eq.s32.totalorder %s26, 1
      %p98 = por %p96, %p97
      %p100 = scmp.ne.s32.totalorder %s85, %s99
      %p101 = scmp.eq.s32.totalorder %s26, 0
      %p102 = por %p100, %p101
      %s103 = ssub.s32 %s27, %s39
      %s104 = ssub.s32 %s28, %s35
      %s105 = sor.u32 %s103, %s104
      %p106 = scmp.eq.s32.totalorder %s105, 0
      %s108 = sadd.s32 %s107, 1
      %s109 = scalar_select %p106, %s107, %s108
      %p112 = pneg %p106
      %p113 = scmp.eq.s32.totalorder %s20, 1
      %p114 = por %p112, %p113
      %p115 = scmp.ne.s32.totalorder %s107, %s110
      %p116 = scmp.eq.s32.totalorder %s20, 0
      %p117 = por %p115, %p116
      %p118 = scmp.ne.s32.totalorder %s107, %s110
      %p119 = scmp.eq.s32.totalorder %s25, 1
      %p120 = por %p118, %p119
      %p121 = scmp.ne.s32.totalorder %s110, %s111
      %p122 = scmp.eq.s32.totalorder %s25, 0
      %p123 = por %p121, %p122
      %p124 = scmp.ne.s32.totalorder %s110, %s111
      %p125 = scmp.eq.s32.totalorder %s26, 1
      %p126 = por %p124, %p125
      %p128 = scmp.ne.s32.totalorder %s111, %s127
      %p129 = scmp.eq.s32.totalorder %s26, 0
      %p130 = por %p128, %p129
      %s131 = ssub.s32 %s27, %s39
      %s132 = ssub.s32 %s28, %s35
      %s133 = sor.u32 %s131, %s132
      %p134 = scmp.eq.s32.totalorder %s133, 0
      %s136 = sadd.s32 %s135, 1
      %s137 = scalar_select %p134, %s135, %s136
      %p140 = pneg %p134
      %p141 = scmp.eq.s32.totalorder %s20, 1
      %p142 = por %p140, %p141
      %p143 = scmp.ne.s32.totalorder %s135, %s138
      %p144 = scmp.eq.s32.totalorder %s20, 0
      %p145 = por %p143, %p144
      %p146 = scmp.ne.s32.totalorder %s135, %s138
      %p147 = scmp.eq.s32.totalorder %s25, 1
      %p148 = por %p146, %p147
      %p149 = scmp.ne.s32.totalorder %s138, %s139
      %p150 = scmp.eq.s32.totalorder %s25, 0
      %p151 = por %p149, %p150
      %p152 = scmp.ne.s32.totalorder %s138, %s139
      %p153 = scmp.eq.s32.totalorder %s26, 1
      %p154 = por %p152, %p153
      %p156 = scmp.ne.s32.totalorder %s139, %s155
      %p157 = scmp.eq.s32.totalorder %s26, 0
      %p158 = por %p156, %p157
      %s159 = ssub.s32 %s27, %s39
      %s160 = ssub.s32 %s28, %s35
      %s161 = sor.u32 %s159, %s160
      %p162 = scmp.eq.s32.totalorder %s161, 0
      %s164 = sadd.s32 %s163, 1
      %s165 = scalar_select %p162, %s163, %s164
      %p168 = pneg %p162
      %p169 = scmp.eq.s32.totalorder %s20, 1
      %p170 = por %p168, %p169
      %p171 = scmp.ne.s32.totalorder %s163, %s166
      %p172 = scmp.eq.s32.totalorder %s20, 0
      %p173 = por %p171, %p172
      %p174 = scmp.ne.s32.totalorder %s163, %s166
      %p175 = scmp.eq.s32.totalorder %s25, 1
      %p176 = por %p174, %p175
      %p177 = scmp.ne.s32.totalorder %s166, %s167
      %p178 = scmp.eq.s32.totalorder %s25, 0
      %p179 = por %p177, %p178
      %p180 = scmp.ne.s32.totalorder %s166, %s167
      %p181 = scmp.eq.s32.totalorder %s26, 1
      %p182 = por %p180, %p181
      %p184 = scmp.ne.s32.totalorder %s167, %s183
      %p185 = scmp.eq.s32.totalorder %s26, 0
      %p186 = por %p184, %p185
      %p187 = scmp.le.s32.totalorder 1, %s20
      %p188 = scmp.lt.s32.totalorder %s20, 3
      %p189 = pnand %p187, %p188
      %p190 = pneg %p189
      // Predicated region
      $region9: #{tpu_custom_call.1} parent=5 // pred_check
        _
      $region10: #{tpu_custom_call.1} parent=5 // pred_check_branch
        %192 = sbr.rel (%p189) target = $region12
      $region11: #{tpu_custom_call.1} parent=5 // pred_region
        %s193 = ssub.s32 %s20, 1
        // Predicated region
        $region13: #{tpu_custom_call.1} parent=11 // pred_check
          %p194 = pneg %p53
        $region14: #{tpu_custom_call.1} parent=11 // pred_check_branch
          %196 = sbr.rel (%p194) target = $region16
        $region15: #{tpu_custom_call.1} parent=11 // pred_region
          %s198 = ssub.s32 64, 64
          %199 = vsyncadd [#allocation5], %s198
          %202 = dma.hbm_to_smem %s0, 64, [#allocation2], [#allocation5]
        $region16: #{tpu_custom_call.1} parent=11 // pred_fallthru
          _
        // Predicated region
        $region17: #{tpu_custom_call.1} parent=11 // pred_check
          %p203 = pneg %p74
        $region18: #{tpu_custom_call.1} parent=11 // pred_check_branch
          %205 = sbr.rel (%p203) target = $region20
        $region19: #{tpu_custom_call.1} parent=11 // pred_region
          %s207 = ssub.s32 64, 64
          %208 = vsyncadd [#allocation8], %s207
          %211 = dma.hbm_to_smem %s1, 64, [#allocation7], [#allocation8]
        $region20: #{tpu_custom_call.1} parent=11 // pred_fallthru
          _
        // Predicated region
        $region21: #{tpu_custom_call.1} parent=11 // pred_check
          %p212 = pneg %p95
        $region22: #{tpu_custom_call.1} parent=11 // pred_check_branch
          %214 = sbr.rel (%p212) target = $region24
        $region23: #{tpu_custom_call.1} parent=11 // pred_region
          %s216 = ssub.s32 16, 16
          %217 = vsyncadd [#allocation6], %s216
          %s219 = sshll.u32 %s2, 4
          %s220 = int_to_ptr.vmem [resolvable:$true] %s219
          %222 = dma.vmem_to_smem %s220, 16, [#allocation9], [#allocation6]
        $region24: #{tpu_custom_call.1} parent=11 // pred_fallthru
          _
      $region12: #{tpu_custom_call.1} parent=5 // pred_fallthru
        _
      %p223 = scmp.lt.s32.totalorder %s20, 2
      // Predicated region
      $region25: #{tpu_custom_call.1} parent=5 // pred_check
        %p224 = pneg %p223
      $region26: #{tpu_custom_call.1} parent=5 // pred_check_branch
        %226 = sbr.rel (%p224) target = $region28
      $region27: #{tpu_custom_call.1} parent=5 // pred_region
        // Predicated region
        $region29: #{tpu_custom_call.1} parent=27 // pred_check
          %p227 = pneg %p117
        $region30: #{tpu_custom_call.1} parent=27 // pred_check_branch
          %229 = sbr.rel (%p227) target = $region32
        $region31: #{tpu_custom_call.1} parent=27 // pred_region
          %s230 = sand.u32 %s107, 1
          %s231 = scalar_lea.sflag [#allocation3], %s230
          %s232 = sand.u32 %s107, 1
          %s233 = smul.addr %s232, 6
          %s234 = scalar_lea.vmem [#allocation10], %s233
          %s236 = ssub.s32 96, 96
          %237 = vsyncadd %s231, %s236
          %s238 = smul.addr %s27, 3
          %s239 = sadd.s32 %s28, %s238
          %s240 = smul.addr %s239, 32
          %s241 = scalar_lea.hbm %s3, %s240
          %s242 = sshll.u32 %s234, 4
          %s243 = int_to_ptr.vmem [resolvable:$true] %s242
          %248 = dma.hbm_to_vmem [thread:$0]  %s241, 96, %s243, %s231, 32, 32, 2
        $region32: #{tpu_custom_call.1} parent=27 // pred_fallthru
          _
        // Predicated region
        $region33: #{tpu_custom_call.1} parent=27 // pred_check
          %p249 = pneg %p145
        $region34: #{tpu_custom_call.1} parent=27 // pred_check_branch
          %251 = sbr.rel (%p249) target = $region36
        $region35: #{tpu_custom_call.1} parent=27 // pred_region
          %p252 = scmp.lt.s32.totalorder %s27, 1
          %s253 = scalar_select %p252, %s27, 1
          %p254 = scmp.lt.s32.totalorder %s28, 0
          %s255 = scalar_select %p254, %s28, 0
          %s256 = smul.addr %s253, 3
          %s257 = sadd.s32 %s255, %s256
          %s258 = smul.addr %s257, 2
          %s259 = scalar_lea.vmem %s4, %s258
        $region36: #{tpu_custom_call.1} parent=27 // pred_fallthru
          _
      $region28: #{tpu_custom_call.1} parent=5 // pred_fallthru
        _
      %p260 = scmp.le.s32.totalorder 1, %s20
      %p261 = scmp.lt.s32.totalorder %s20, 3
      %p262 = pnand %p260, %p261
      %p263 = pneg %p262
      // Predicated region
      $region37: #{tpu_custom_call.1} parent=5 // pred_check
        _
      $region38: #{tpu_custom_call.1} parent=5 // pred_check_branch
        %265 = sbr.rel (%p262) target = $region40
      $region39: #{tpu_custom_call.1} parent=5 // pred_region
        %s266 = ssub.s32 %s20, 1
        // Predicated region
        $region41: #{tpu_custom_call.1} parent=39 // pred_check
          %p267 = pneg %p53
        $region42: #{tpu_custom_call.1} parent=39 // pred_check_branch
          %269 = sbr.rel (%p267) target = $region44
        $region43: #{tpu_custom_call.1} parent=39 // pred_region
          %270 = dma.done [#allocation5], 64
        $region44: #{tpu_custom_call.1} parent=39 // pred_fallthru
          _
        // Predicated region
        $region45: #{tpu_custom_call.1} parent=39 // pred_check
          %p271 = pneg %p74
        $region46: #{tpu_custom_call.1} parent=39 // pred_check_branch
          %273 = sbr.rel (%p271) target = $region48
        $region47: #{tpu_custom_call.1} parent=39 // pred_region
          %274 = dma.done [#allocation8], 64
        $region48: #{tpu_custom_call.1} parent=39 // pred_fallthru
          _
        // Predicated region
        $region49: #{tpu_custom_call.1} parent=39 // pred_check
          %p275 = pneg %p95
        $region50: #{tpu_custom_call.1} parent=39 // pred_check_branch
          %277 = sbr.rel (%p275) target = $region52
        $region51: #{tpu_custom_call.1} parent=39 // pred_region
          %278 = dma.done [#allocation6], 16
        $region52: #{tpu_custom_call.1} parent=39 // pred_fallthru
          _
        %s279 = sand.u32 %s110, 1
        %s280 = scalar_lea.sflag [#allocation3], %s279
        %s281 = sand.u32 %s110, 1
        %s282 = smul.addr %s281, 6
        %s283 = scalar_lea.vmem [#allocation10], %s282
        // Predicated region
        $region53: #{tpu_custom_call.1} parent=39 // pred_check
          %p284 = pneg %p123
        $region54: #{tpu_custom_call.1} parent=39 // pred_check_branch
          %286 = sbr.rel (%p284) target = $region56
        $region55: #{tpu_custom_call.1} parent=39 // pred_region
          %287 = dma.done %s280, 96
        $region56: #{tpu_custom_call.1} parent=39 // pred_fallthru
          _
        %288 = sfence
        %p289 = pneg %p53
        %p290 = pneg %p50
        %p291 = pneg %p74
        %p292 = pneg %p71
        %p293 = pneg %p95
        %p294 = pneg %p92
        %s295 = sand.u32 %s110, 1
        %s296 = scalar_lea.sflag [#allocation3], %s295
        %s297 = sand.u32 %s110, 1
        %s298 = smul.addr %s297, 6
        %s299 = scalar_lea.vmem [#allocation10], %s298
        %p300 = pneg %p123
        %p301 = pneg %p120
        %p302 = scmp.lt.s32.totalorder %s29, 1
        %s303 = scalar_select %p302, %s29, 1
        %p304 = scmp.lt.s32.totalorder %s30, 0
        %s305 = scalar_select %p304, %s30, 0
        %s306 = smul.addr %s303, 3
        %s307 = sadd.s32 %s305, %s306
        %s308 = smul.addr %s307, 2
        %s309 = scalar_lea.vmem %s4, %s308
        %p310 = pneg %p151
        %p311 = pneg %p148
        %p312 = pneg %p179
        %p313 = pneg %p176
        %s314 = sand.u32 %s166, 1
        %s315 = scalar_lea.sflag [#allocation4], %s314
        %s316 = sand.u32 %s166, 1
        %s317 = smul.addr %s316, 6
        %s318 = scalar_lea.vmem [#allocation11], %s317
        %p319 = scmp.lt.s32.totalorder %s29, 1
        %s320 = scalar_select %p319, %s29, 1
        %p321 = scmp.lt.s32.totalorder %s30, 0
        %s322 = scalar_select %p321, %s30, 0
        %s323 = smul.addr %s320, 3
        %s324 = sadd.s32 %s322, %s323
        %s325 = smul.addr %s324, 2
        %s326 = scalar_lea.vmem %s4, %s325
        %v327 = vld [vmem:[%s283] sm:$0x3]
        %s328 = sld [smem:[#allocation2]]
        %v329 = vstv %s328
        %v330 = vmul.f32 %v327, %v329
        %s331 = scalar_lea.vmem %s283, 2 [#allocation10]
        %v332 = vld [vmem:[%s331] sm:$0x3]
        %s333 = sld [smem:[#allocation2 + $0x1]]
        %v334 = vstv %s333
        %v335 = vmul.f32 %v332, %v334
        %v336 = vadd.f32 %v330, %v335
        %s337 = scalar_lea.vmem %s283, 4 [#allocation10]
        %v338 = vld [vmem:[%s337] sm:$0x3]
        %s339 = sld [smem:[#allocation2 + $0x2]]
        %v340 = vstv %s339
        %v341 = vmul.f32 %v338, %v340
        %v342 = vadd.f32 %v336, %v341
        %v343 = vld [vmem:[%s326] sm:$0x3]
        %s344 = sld [smem:[#allocation7]]
        %v345 = vstv %s344
        %v346 = vmul.f32 %v343, %v345
        %v347 = vadd.f32 %v342, %v346
        %s348 = scalar_lea.vmem %s326, 2
        %v349 = vld [vmem:[%s348] sm:$0x3]
        %s350 = sld [smem:[#allocation7 + $0x1]]
        %v351 = vstv %s350
        %v352 = vmul.f32 %v349, %v351
        %v353 = vadd.f32 %v347, %v352
        %s354 = scalar_lea.vmem %s326, 4
        %v355 = vld [vmem:[%s354] sm:$0x3]
        %s356 = sld [smem:[#allocation7 + $0x2]]
        %v357 = vstv %s356
        %v358 = vmul.f32 %v355, %v357
        %v359 = vadd.f32 %v353, %v358
        %s360 = sld [smem:[#allocation9]]
        %v361 = vstv %s360
        %v362 = vadd.f32 %v359, %v361
        %363 = vst [vmem:[%s318] sm:$0x3] %v362
        %v364 = vld [vmem:[%s283] sm:$0x3]
        %s365 = sld [smem:[#allocation2 + $0x80]]
        %v366 = vstv %s365
        %v367 = vmul.f32 %v364, %v366
        %v368 = vld [vmem:[%s331] sm:$0x3]
        %s369 = sld [smem:[#allocation2 + $0x81]]
        %v370 = vstv %s369
        %v371 = vmul.f32 %v368, %v370
        %v372 = vadd.f32 %v367, %v371
        %v373 = vld [vmem:[%s337] sm:$0x3]
        %s374 = sld [smem:[#allocation2 + $0x82]]
        %v375 = vstv %s374
        %v376 = vmul.f32 %v373, %v375
        %v377 = vadd.f32 %v372, %v376
        %v378 = vld [vmem:[%s326] sm:$0x3]
        %s379 = sld [smem:[#allocation7 + $0x80]]
        %v380 = vstv %s379
        %v381 = vmul.f32 %v378, %v380
        %v382 = vadd.f32 %v377, %v381
        %v383 = vld [vmem:[%s348] sm:$0x3]
        %s384 = sld [smem:[#allocation7 + $0x81]]
        %v385 = vstv %s384
        %v386 = vmul.f32 %v383, %v385
        %v387 = vadd.f32 %v382, %v386
        %v388 = vld [vmem:[%s354] sm:$0x3]
        %s389 = sld [smem:[#allocation7 + $0x82]]
        %v390 = vstv %s389
        %v391 = vmul.f32 %v388, %v390
        %v392 = vadd.f32 %v387, %v391
        %s393 = sld [smem:[#allocation9 + $0x1]]
        %v394 = vstv %s393
        %v395 = vadd.f32 %v392, %v394
        %s396 = scalar_lea.vmem %s318, 2 [#allocation11]
        %397 = vst [vmem:[%s396] sm:$0x3] %v395
        %v398 = vld [vmem:[%s283] sm:$0x3]
        %s399 = sld [smem:[#allocation2 + $0x100]]
        %v400 = vstv %s399
        %v401 = vmul.f32 %v398, %v400
        %v402 = vld [vmem:[%s331] sm:$0x3]
        %s403 = sld [smem:[#allocation2 + $0x101]]
        %v404 = vstv %s403
        %v405 = vmul.f32 %v402, %v404
        %v406 = vadd.f32 %v401, %v405
        %v407 = vld [vmem:[%s337] sm:$0x3]
        %s408 = sld [smem:[#allocation2 + $0x102]]
        %v409 = vstv %s408
        %v410 = vmul.f32 %v407, %v409
        %v411 = vadd.f32 %v406, %v410
        %v412 = vld [vmem:[%s326] sm:$0x3]
        %s413 = sld [smem:[#allocation7 + $0x100]]
        %v414 = vstv %s413
        %v415 = vmul.f32 %v412, %v414
        %v416 = vadd.f32 %v411, %v415
        %v417 = vld [vmem:[%s348] sm:$0x3]
        %s418 = sld [smem:[#allocation7 + $0x101]]
        %v419 = vstv %s418
        %v420 = vmul.f32 %v417, %v419
        %v421 = vadd.f32 %v416, %v420
        %v422 = vld [vmem:[%s354] sm:$0x3]
        %s423 = sld [smem:[#allocation7 + $0x102]]
        %v424 = vstv %s423
        %v425 = vmul.f32 %v422, %v424
        %v426 = vadd.f32 %v421, %v425
        %s427 = sld [smem:[#allocation9 + $0x2]]
        %v428 = vstv %s427
        %v429 = vadd.f32 %v426, %v428
        %s430 = scalar_lea.vmem %s318, 4 [#allocation11]
        %431 = vst [vmem:[%s430] sm:$0x3] %v429
        %s432 = sand.u32 %s166, 1
        %s433 = scalar_lea.sflag [#allocation4], %s432
        %s434 = sand.u32 %s166, 1
        %s435 = smul.addr %s434, 6
        %s436 = scalar_lea.vmem [#allocation11], %s435
        // Predicated region
        $region57: #{tpu_custom_call.1} parent=39 // pred_check
          %p437 = pneg %p176
        $region58: #{tpu_custom_call.1} parent=39 // pred_check_branch
          %439 = sbr.rel (%p437) target = $region60
        $region59: #{tpu_custom_call.1} parent=39 // pred_region
          %s441 = ssub.s32 96, 96
          %442 = vsyncadd %s433, %s441
          %s443 = smul.addr %s29, 3
          %s444 = sadd.s32 %s30, %s443
          %s445 = smul.addr %s444, 32
          %s446 = scalar_lea.hbm %s5, %s445
          %s447 = sshll.u32 %s436, 4
          %s448 = int_to_ptr.vmem [resolvable:$true] %s447
          %453 = dma.vmem_to_hbm [thread:$0]  %s448, 96, %s446, %s433, 32, 32, 2
        $region60: #{tpu_custom_call.1} parent=39 // pred_fallthru
          _
      $region40: #{tpu_custom_call.1} parent=5 // pred_fallthru
        _
      %p454 = scmp.le.s32.totalorder 2, %s20
      // Predicated region
      $region61: #{tpu_custom_call.1} parent=5 // pred_check
        %p455 = pneg %p454
      $region62: #{tpu_custom_call.1} parent=5 // pred_check_branch
        %457 = sbr.rel (%p455) target = $region64
      $region63: #{tpu_custom_call.1} parent=5 // pred_region
        %s458 = ssub.s32 %s20, 2
        // Predicated region
        $region65: #{tpu_custom_call.1} parent=63 // pred_check
          %p459 = pneg %p182
        $region66: #{tpu_custom_call.1} parent=63 // pred_check_branch
          %461 = sbr.rel (%p459) target = $region68
        $region67: #{tpu_custom_call.1} parent=63 // pred_region
          %s462 = sand.u32 %s167, 1
          %s463 = scalar_lea.sflag [#allocation4], %s462
          %s464 = sand.u32 %s167, 1
          %s465 = smul.addr %s464, 6
          %s466 = scalar_lea.vmem [#allocation11], %s465
          %467 = dma.done %s463, 96
        $region68: #{tpu_custom_call.1} parent=63 // pred_fallthru
          _
      $region64: #{tpu_custom_call.1} parent=5 // pred_fallthru
        _
    $region6: #{tpu_custom_call.1} parent=1 // loop_footer
      %s24 = sadd.s32 1, %s20
    $region7: #{tpu_custom_call.1} parent=1 // loop_footer_branch
      %19 = sbr.rel target = $region3
    $region8: #{tpu_custom_call.1} parent=1 // loop_exit
      _
    %468 = vsyncpa [#allocation3], 1
    %s469 = scalar_lea.sflag [#allocation3], 1
    %470 = vsyncpa %s469, 1
    %471 = vsyncpa [#allocation4], 1
    %s472 = scalar_lea.sflag [#allocation4], 1
    %473 = vsyncpa %s472, 1
    %474 = vsyncpa [#allocation5], 1
    %s475 = scalar_lea.sflag [#allocation5], 1
    %476 = vsyncpa %s475, 1
    %477 = vsyncpa [#allocation8], 1
    %478 = vsyncpa [#allocation6], 1
    %s479 = scalar_lea.sflag [#allocation6], 1
    %480 = vsyncpa %s479, 1

</llo_original>
